<compile_context>
chip_gen: v6e
topology: v6e:2x2x1
jax: 0.10.0
libtpu: 0.0.40
codegen_flags: <defaults>
</compile_context>

<pallas_src>
import functools

import jax
import jax.numpy as jnp
from jax.experimental import pallas as pl
from jax.experimental.pallas import tpu as pltpu


def _embed_kernel(ids_ref, w_ref, out_ref):
    """ids_ref: (rows, P) int32, w_ref: (P*V, P*D), out_ref: (rows, P*D)."""
    rows, p_pack = ids_ref.shape
    pv = w_ref.shape[0]
    v = pv // p_pack

    lane = jax.lax.broadcasted_iota(jnp.int32, (rows, pv), 1)   # (rows, P*V)
    onehot = jnp.zeros((rows, pv), dtype=w_ref.dtype)
    # Short static loop (P <= 16): each id column lights up one lane inside its
    # own V-wide block, matching the block-diagonal packed table.
    for p in range(p_pack):
        col = ids_ref[:, p:p + 1]                               # (rows, 1) int32
        onehot = onehot + (lane == (col + p * v)).astype(w_ref.dtype)

    out_ref[...] = jnp.dot(
        onehot, w_ref[...], preferred_element_type=jnp.float32
    ).astype(out_ref.dtype)


@functools.partial(jax.jit, static_argnames=("tb",))
def embedding2d_forward(token_ids, weight, tb=256):
    """token_ids: int array [...]; weight: [V, D]. Returns token_ids.shape + (D,)."""
    V, D = weight.shape
    itemsize = jnp.dtype(weight.dtype).itemsize
    orig_shape = token_ids.shape
    ids_flat = token_ids.reshape(-1).astype(jnp.int32)
    n = ids_flat.shape[0]

    # ---- lane-packing factor (make the output block 128 lanes wide) ---------
    if D >= 128 or (128 % D) != 0:
        pack = 1
    else:
        pack = 128 // D
    # Packed table is replicated pack x pack; keep that VMEM cost bounded.
    if pack > 1 and pack * pack * V * D * itemsize > (8 << 20):
        pack = 1  # TODO(synk): large-V path should be a DMA row gather instead.

    # ---- tile size: rows per step must stay sublane (8) aligned --------------
    tb = max(int(tb), 8 * pack)
    tb = ((tb + 8 * pack - 1) // (8 * pack)) * (8 * pack)
    rows = tb // pack

    n_pad = pl.cdiv(n, tb) * tb
    ids_flat = jnp.pad(ids_flat, (0, n_pad - n))
    ids2d = ids_flat.reshape(n_pad // pack, pack)               # (N/P, P) int32

    # ---- block-diagonal packed table: W_packed[p*V+v, p*D+d] = W[v, d] -------
    if pack == 1:
        w_packed = weight
    else:
        eye = jnp.eye(pack, dtype=weight.dtype)
        w_packed = jnp.einsum("pq,vd->pvqd", eye, weight).reshape(
            pack * V, pack * D)

    num_tiles = n_pad // tb
    block_bytes = (rows * pack * 4
                   + pack * V * pack * D * itemsize
                   + rows * pack * D * itemsize)
    vmem_limit = int(min(max(3 * block_bytes, 32 << 20), 96 << 20))

    cost = pl.CostEstimate(
        flops=0,                      # this is a memory-bound gather, not GEMM
        transcendentals=0,
        bytes_accessed=int(n_pad * 4                               # ids in
                           + pack * V * pack * D * itemsize        # table once
                           + n_pad * D * itemsize),                # output out
    )

    out_packed = pl.pallas_call(
        _embed_kernel,
        out_shape=jax.ShapeDtypeStruct((n_pad // pack, pack * D), weight.dtype),
        grid_spec=pltpu.PrefetchScalarGridSpec(
            num_scalar_prefetch=0,
            grid=(num_tiles,),
            in_specs=[
                pl.BlockSpec((rows, pack), lambda i: (i, 0)),          # ids tile
                pl.BlockSpec((pack * V, pack * D), lambda i: (0, 0)),  # table
            ],
            out_specs=pl.BlockSpec((rows, pack * D), lambda i: (i, 0)),
        ),
        compiler_params=pltpu.CompilerParams(
            dimension_semantics=("parallel",),
            vmem_limit_bytes=vmem_limit,
        ),
        cost_estimate=cost,
    )(ids2d, w_packed)

    # Packed row r holds logical rows r*P .. r*P+P-1 contiguously, so a plain
    # (free, row-major) reshape unpacks it.
    out = out_packed.reshape(n_pad, D)[:n]
    return out.reshape(*orig_shape, D)


if __name__ == "__main__":
    key = jax.random.PRNGKey(0)
    k_w, k_ids = jax.random.split(key)

    # Small shapes consistent with the module's forward:
    # m=2 batches, max_num_doms=4, max_chars_len=8, vocab V=32, embed dim D=32.
    m, doms, chars = 2, 4, 8
    V, D = 32, 32

    weight = jax.random.normal(k_w, (V, D), dtype=jnp.float32)
    token_ids = jax.random.randint(k_ids, (m, doms, chars), 0, V, dtype=jnp.int32)

    out = embedding2d_forward(token_ids, weight)
    out = jax.block_until_ready(out)

    # Reference check: plain JAX embedding lookup (== nn.Embedding forward).
    ref = weight[token_ids]
    assert out.shape == (m, doms, chars, D)
    assert jnp.allclose(out, ref, atol=1e-5), "mismatch vs reference gather"

    print("KERNEL_OK")
</pallas_src>

<mosaic_0001>
module attributes {stable_mosaic.version = 11 : i64} {
  func.func @_embed_kernel(%arg0: i32, %arg1: memref<64x4xi32, #tpu.memory_space<vmem>>, %arg2: memref<128x128xf32, #tpu.memory_space<vmem>>, %arg3: memref<64x128xf32, #tpu.memory_space<vmem>>) attributes {dimension_semantics = [#tpu.dimension_semantics<parallel>], iteration_bounds = array<i64: 1>, scalar_prefetch = 0 : i64, scratch_operands = 0 : i64, tpu.core_type = #tpu.core_type<tc>, window_params = [{transform_indices = @transform_0, window_bounds = array<i64: 64, 4>}, {pipeline_mode = #tpu.pipeline_mode<synchronous>, transform_indices = @transform_1, window_bounds = array<i64: 128, 128>}, {transform_indices = @transform_2, window_bounds = array<i64: 64, 128>}]} {
    %0 = tpu.iota {dimensions = array<i32: 1>} : vector<64x128xi32>
    %cst = arith.constant 0.000000e+00 : f32
    %1 = vector.broadcast %cst : f32 to vector<64x128xf32>
    %c0 = arith.constant 0 : index
    %c0_0 = arith.constant 0 : index
    %2 = vector.load %arg1[%c0, %c0_0] : memref<64x4xi32, #tpu.memory_space<vmem>>, vector<64x1xi32>
    %c0_i32 = arith.constant 0 : i32
    %3 = vector.broadcast %c0_i32 : i32 to vector<64x1xi32>
    %4 = arith.addi %2, %3 : vector<64x1xi32>
    %5 = vector.broadcast %4 : vector<64x1xi32> to vector<64x128xi32>
    %6 = arith.cmpi eq, %0, %5 : vector<64x128xi32>
    %7 = arith.extui %6 : vector<64x128xi1> to vector<64x128xi32>
    %8 = arith.sitofp %7 : vector<64x128xi32> to vector<64x128xf32>
    %9 = arith.addf %1, %8 : vector<64x128xf32>
    %c0_1 = arith.constant 0 : index
    %c1 = arith.constant 1 : index
    %10 = vector.load %arg1[%c0_1, %c1] : memref<64x4xi32, #tpu.memory_space<vmem>>, vector<64x1xi32>
    %c32_i32 = arith.constant 32 : i32
    %11 = vector.broadcast %c32_i32 : i32 to vector<64x1xi32>
    %12 = arith.addi %10, %11 : vector<64x1xi32>
    %13 = vector.broadcast %12 : vector<64x1xi32> to vector<64x128xi32>
    %14 = arith.cmpi eq, %0, %13 : vector<64x128xi32>
    %15 = arith.extui %14 : vector<64x128xi1> to vector<64x128xi32>
    %16 = arith.sitofp %15 : vector<64x128xi32> to vector<64x128xf32>
    %17 = arith.addf %9, %16 : vector<64x128xf32>
    %c0_2 = arith.constant 0 : index
    %c2 = arith.constant 2 : index
    %18 = vector.load %arg1[%c0_2, %c2] : memref<64x4xi32, #tpu.memory_space<vmem>>, vector<64x1xi32>
    %c64_i32 = arith.constant 64 : i32
    %19 = vector.broadcast %c64_i32 : i32 to vector<64x1xi32>
    %20 = arith.addi %18, %19 : vector<64x1xi32>
    %21 = vector.broadcast %20 : vector<64x1xi32> to vector<64x128xi32>
    %22 = arith.cmpi eq, %0, %21 : vector<64x128xi32>
    %23 = arith.extui %22 : vector<64x128xi1> to vector<64x128xi32>
    %24 = arith.sitofp %23 : vector<64x128xi32> to vector<64x128xf32>
    %25 = arith.addf %17, %24 : vector<64x128xf32>
    %c0_3 = arith.constant 0 : index
    %c3 = arith.constant 3 : index
    %26 = vector.load %arg1[%c0_3, %c3] : memref<64x4xi32, #tpu.memory_space<vmem>>, vector<64x1xi32>
    %c96_i32 = arith.constant 96 : i32
    %27 = vector.broadcast %c96_i32 : i32 to vector<64x1xi32>
    %28 = arith.addi %26, %27 : vector<64x1xi32>
    %29 = vector.broadcast %28 : vector<64x1xi32> to vector<64x128xi32>
    %30 = arith.cmpi eq, %0, %29 : vector<64x128xi32>
    %31 = arith.extui %30 : vector<64x128xi1> to vector<64x128xi32>
    %32 = arith.sitofp %31 : vector<64x128xi32> to vector<64x128xf32>
    %33 = arith.addf %25, %32 : vector<64x128xf32>
    %c0_4 = arith.constant 0 : index
    %c0_5 = arith.constant 0 : index
    %34 = vector.load %arg2[%c0_4, %c0_5] : memref<128x128xf32, #tpu.memory_space<vmem>>, vector<128x128xf32>
    %cst_6 = arith.constant dense<0.000000e+00> : vector<64x128xf32>
    %35 = tpu.matmul %33, %34, %cst_6 {dimension_numbers = #tpu.dot_dimension_numbers<[1], [0], [0], [1], [0, 0, 1, 1], [], []>} : vector<64x128xf32>, vector<128x128xf32>, vector<64x128xf32> -> vector<64x128xf32>
    %c0_7 = arith.constant 0 : index
    %c0_8 = arith.constant 0 : index
    %36 = vector.load %arg3[%c0_7, %c0_8] : memref<64x128xf32, #tpu.memory_space<vmem>>, vector<64x128xf32>
    tpu.vector_store %arg3[%c0_7, %c0_8], %35 {strides = array<i32>} : memref<64x128xf32, #tpu.memory_space<vmem>>, vector<64x128xf32>,
    return
  }
  func.func @transform_0(%arg0: i32) -> (i32, i32) {
    %c0_i32 = arith.constant 0 : i32
    %c0_i32_0 = arith.constant 0 : i32
    return %arg0, %c0_i32 : i32, i32
  }
  func.func @transform_1(%arg0: i32) -> (i32, i32) {
    %c0_i32 = arith.constant 0 : i32
    %c0_i32_0 = arith.constant 0 : i32
    %c0_i32_1 = arith.constant 0 : i32
    return %c0_i32, %c0_i32_0 : i32, i32
  }
  func.func @transform_2(%arg0: i32) -> (i32, i32) {
    %c0_i32 = arith.constant 0 : i32
    %c0_i32_0 = arith.constant 0 : i32
    return %arg0, %c0_i32 : i32, i32
  }
}

</mosaic_0001>

<llo_original>
// kernel: embedding2d_forward.1
$region0: #{embedding2d_forward.1}
  #allocation0 [shape = 'u32[]', space=smem, size = 0x4, offset = 0x4, fixed_abs, tag = 'smem constant byte address 0x4 - core index']
  #allocation1 [shape = 'u32[144,128]{1,0:T(1,128)}', space=vmem, size = 0x12000, scoped, tag = 'internal scratch']
  %s0 = inlined_call_operand.vmem [shape: s32[64,4], index: 0, kind: input, shape index: {}]
  %s1 = inlined_call_operand.vmem [shape: f32[128,128], index: 1, kind: input, shape index: {}]
  %s2 = inlined_call_operand.vmem [shape: f32[64,128], index: 2, kind: output, shape index: {}]
  %s3 = sld [smem:[#allocation0]]
  $region18: #{embedding2d_forward.1} parent=0
    _
  %s5 = ssub.s32 1, %s3
  %s6 = scalar_select 0, %s5, %s3
  // Predicated region
  $region2: #{embedding2d_forward.1} parent=0 // pred_check
    _
  $region3: #{embedding2d_forward.1} parent=0 // pred_check_branch
    %8 = sbr.rel (0) target = $region5
  $region4: #{embedding2d_forward.1} parent=0 // pred_region
    _
  $region5: #{embedding2d_forward.1} parent=0 // pred_fallthru
    _
  // Predicated region
  $region6: #{embedding2d_forward.1} parent=0 // pred_check
    _
  $region7: #{embedding2d_forward.1} parent=0 // pred_check_branch
    %10 = sbr.rel (0) target = $region9
  $region8: #{embedding2d_forward.1} parent=0 // pred_region
    _
  $region9: #{embedding2d_forward.1} parent=0 // pred_fallthru
    _
  %v11 = vlaneseq
  %v12 = vand.u32 %v11, 127
  %v13 = vld [vmem:[%s0] sm:$0xff]
  %v14 = vld [vmem:[%s0 + $0x8] sm:$0xff]
  %v15 = vld [vmem:[%s0 + $0x10] sm:$0xff]
  %v16 = vld [vmem:[%s0 + $0x18] sm:$0xff]
  %v17 = vld [vmem:[%s0 + $0x20] sm:$0xff]
  %v18 = vld [vmem:[%s0 + $0x28] sm:$0xff]
  %v19 = vld [vmem:[%s0 + $0x30] sm:$0xff]
  %v20 = vld [vmem:[%s0 + $0x38] sm:$0xff]
  %21 = vset.pattern.permute.xlu0 0
  %22 = vperm.xlu0 %21, %v13
  %v23 = vpop.permute.xlu0 %22
  %24 = vset.pattern.permute.xlu0 0
  %25 = vperm.xlu0 %24, %v14
  %v26 = vpop.permute.xlu0 %25
  %27 = vset.pattern.permute.xlu0 0
  %28 = vperm.xlu0 %27, %v15
  %v29 = vpop.permute.xlu0 %28
  %30 = vset.pattern.permute.xlu0 0
  %31 = vperm.xlu0 %30, %v16
  %v32 = vpop.permute.xlu0 %31
  %33 = vset.pattern.permute.xlu0 0
  %34 = vperm.xlu0 %33, %v17
  %v35 = vpop.permute.xlu0 %34
  %36 = vset.pattern.permute.xlu0 0
  %37 = vperm.xlu0 %36, %v18
  %v38 = vpop.permute.xlu0 %37
  %39 = vset.pattern.permute.xlu0 0
  %40 = vperm.xlu0 %39, %v19
  %v41 = vpop.permute.xlu0 %40
  %42 = vset.pattern.permute.xlu0 0
  %43 = vperm.xlu0 %42, %v20
  %v44 = vpop.permute.xlu0 %43
  %vm45 = vcmp.eq.s32.totalorder %v12, %v23
  %vm46 = vcmp.eq.s32.totalorder %v12, %v26
  %vm47 = vcmp.eq.s32.totalorder %v12, %v29
  %vm48 = vcmp.eq.s32.totalorder %v12, %v32
  %vm49 = vcmp.eq.s32.totalorder %v12, %v35
  %vm50 = vcmp.eq.s32.totalorder %v12, %v38
  %vm51 = vcmp.eq.s32.totalorder %v12, %v41
  %vm52 = vcmp.eq.s32.totalorder %v12, %v44
  %v53 = vsel %vm45, 1, 0
  %v54 = vsel %vm46, 1, 0
  %v55 = vsel %vm47, 1, 0
  %v56 = vsel %vm48, 1, 0
  %v57 = vsel %vm49, 1, 0
  %v58 = vsel %vm50, 1, 0
  %v59 = vsel %vm51, 1, 0
  %v60 = vsel %vm52, 1, 0
  %v61 = vcvt.s32.f32 %v53
  %v62 = vcvt.s32.f32 %v54
  %v63 = vcvt.s32.f32 %v55
  %v64 = vcvt.s32.f32 %v56
  %v65 = vcvt.s32.f32 %v57
  %v66 = vcvt.s32.f32 %v58
  %v67 = vcvt.s32.f32 %v59
  %v68 = vcvt.s32.f32 %v60
  %v69 = vadd.f32 %v61, 0.0
  %v70 = vadd.f32 %v62, 0.0
  %v71 = vadd.f32 %v63, 0.0
  %v72 = vadd.f32 %v64, 0.0
  %v73 = vadd.f32 %v65, 0.0
  %v74 = vadd.f32 %v66, 0.0
  %v75 = vadd.f32 %v67, 0.0
  %v76 = vadd.f32 %v68, 0.0
  %v77 = vadd.s32 %v13, 32
  %v78 = vadd.s32 %v14, 32
  %v79 = vadd.s32 %v15, 32
  %v80 = vadd.s32 %v16, 32
  %v81 = vadd.s32 %v17, 32
  %v82 = vadd.s32 %v18, 32
  %v83 = vadd.s32 %v19, 32
  %v84 = vadd.s32 %v20, 32
  %85 = vset.pattern.permute.xlu0 1
  %86 = vperm.xlu0 %85, %v77
  %v87 = vpop.permute.xlu0 %86
  %88 = vset.pattern.permute.xlu0 1
  %89 = vperm.xlu0 %88, %v78
  %v90 = vpop.permute.xlu0 %89
  %91 = vset.pattern.permute.xlu0 1
  %92 = vperm.xlu0 %91, %v79
  %v93 = vpop.permute.xlu0 %92
  %94 = vset.pattern.permute.xlu0 1
  %95 = vperm.xlu0 %94, %v80
  %v96 = vpop.permute.xlu0 %95
  %97 = vset.pattern.permute.xlu0 1
  %98 = vperm.xlu0 %97, %v81
  %v99 = vpop.permute.xlu0 %98
  %100 = vset.pattern.permute.xlu0 1
  %101 = vperm.xlu0 %100, %v82
  %v102 = vpop.permute.xlu0 %101
  %103 = vset.pattern.permute.xlu0 1
  %104 = vperm.xlu0 %103, %v83
  %v105 = vpop.permute.xlu0 %104
  %106 = vset.pattern.permute.xlu0 1
  %107 = vperm.xlu0 %106, %v84
  %v108 = vpop.permute.xlu0 %107
  %vm109 = vcmp.eq.s32.totalorder %v12, %v87
  %vm110 = vcmp.eq.s32.totalorder %v12, %v90
  %vm111 = vcmp.eq.s32.totalorder %v12, %v93
  %vm112 = vcmp.eq.s32.totalorder %v12, %v96
  %vm113 = vcmp.eq.s32.totalorder %v12, %v99
  %vm114 = vcmp.eq.s32.totalorder %v12, %v102
  %vm115 = vcmp.eq.s32.totalorder %v12, %v105
  %vm116 = vcmp.eq.s32.totalorder %v12, %v108
  %v117 = vsel %vm109, 1, 0
  %v118 = vsel %vm110, 1, 0
  %v119 = vsel %vm111, 1, 0
  %v120 = vsel %vm112, 1, 0
  %v121 = vsel %vm113, 1, 0
  %v122 = vsel %vm114, 1, 0
  %v123 = vsel %vm115, 1, 0
  %v124 = vsel %vm116, 1, 0
  %v125 = vcvt.s32.f32 %v117
  %v126 = vcvt.s32.f32 %v118
  %v127 = vcvt.s32.f32 %v119
  %v128 = vcvt.s32.f32 %v120
  %v129 = vcvt.s32.f32 %v121
  %v130 = vcvt.s32.f32 %v122
  %v131 = vcvt.s32.f32 %v123
  %v132 = vcvt.s32.f32 %v124
  %v133 = vadd.f32 %v69, %v125
  %v134 = vadd.f32 %v70, %v126
  %v135 = vadd.f32 %v71, %v127
  %v136 = vadd.f32 %v72, %v128
  %v137 = vadd.f32 %v73, %v129
  %v138 = vadd.f32 %v74, %v130
  %v139 = vadd.f32 %v75, %v131
  %v140 = vadd.f32 %v76, %v132
  %v141 = vadd.s32 %v13, 64
  %v142 = vadd.s32 %v14, 64
  %v143 = vadd.s32 %v15, 64
  %v144 = vadd.s32 %v16, 64
  %v145 = vadd.s32 %v17, 64
  %v146 = vadd.s32 %v18, 64
  %v147 = vadd.s32 %v19, 64
  %v148 = vadd.s32 %v20, 64
  %149 = vset.pattern.permute.xlu0 2
  %150 = vperm.xlu0 %149, %v141
  %v151 = vpop.permute.xlu0 %150
  %152 = vset.pattern.permute.xlu0 2
  %153 = vperm.xlu0 %152, %v142
  %v154 = vpop.permute.xlu0 %153
  %155 = vset.pattern.permute.xlu0 2
  %156 = vperm.xlu0 %155, %v143
  %v157 = vpop.permute.xlu0 %156
  %158 = vset.pattern.permute.xlu0 2
  %159 = vperm.xlu0 %158, %v144
  %v160 = vpop.permute.xlu0 %159
  %161 = vset.pattern.permute.xlu0 2
  %162 = vperm.xlu0 %161, %v145
  %v163 = vpop.permute.xlu0 %162
  %164 = vset.pattern.permute.xlu0 2
  %165 = vperm.xlu0 %164, %v146
  %v166 = vpop.permute.xlu0 %165
  %167 = vset.pattern.permute.xlu0 2
  %168 = vperm.xlu0 %167, %v147
  %v169 = vpop.permute.xlu0 %168
  %170 = vset.pattern.permute.xlu0 2
  %171 = vperm.xlu0 %170, %v148
  %v172 = vpop.permute.xlu0 %171
  %vm173 = vcmp.eq.s32.totalorder %v12, %v151
  %vm174 = vcmp.eq.s32.totalorder %v12, %v154
  %vm175 = vcmp.eq.s32.totalorder %v12, %v157
  %vm176 = vcmp.eq.s32.totalorder %v12, %v160
  %vm177 = vcmp.eq.s32.totalorder %v12, %v163
  %vm178 = vcmp.eq.s32.totalorder %v12, %v166
  %vm179 = vcmp.eq.s32.totalorder %v12, %v169
  %vm180 = vcmp.eq.s32.totalorder %v12, %v172
  %v181 = vsel %vm173, 1, 0
  %v182 = vsel %vm174, 1, 0
  %v183 = vsel %vm175, 1, 0
  %v184 = vsel %vm176, 1, 0
  %v185 = vsel %vm177, 1, 0
  %v186 = vsel %vm178, 1, 0
  %v187 = vsel %vm179, 1, 0
  %v188 = vsel %vm180, 1, 0
  %v189 = vcvt.s32.f32 %v181
  %v190 = vcvt.s32.f32 %v182
  %v191 = vcvt.s32.f32 %v183
  %v192 = vcvt.s32.f32 %v184
  %v193 = vcvt.s32.f32 %v185
  %v194 = vcvt.s32.f32 %v186
  %v195 = vcvt.s32.f32 %v187
  %v196 = vcvt.s32.f32 %v188
  %v197 = vadd.f32 %v133, %v189
  %v198 = vadd.f32 %v134, %v190
  %v199 = vadd.f32 %v135, %v191
  %v200 = vadd.f32 %v136, %v192
  %v201 = vadd.f32 %v137, %v193
  %v202 = vadd.f32 %v138, %v194
  %v203 = vadd.f32 %v139, %v195
  %v204 = vadd.f32 %v140, %v196
  %v205 = vadd.s32 %v13, 96
  %v206 = vadd.s32 %v14, 96
  %v207 = vadd.s32 %v15, 96
  %v208 = vadd.s32 %v16, 96
  %v209 = vadd.s32 %v17, 96
  %v210 = vadd.s32 %v18, 96
  %v211 = vadd.s32 %v19, 96
  %v212 = vadd.s32 %v20, 96
  %213 = vset.pattern.permute.xlu0 3
  %214 = vperm.xlu0 %213, %v205
  %v215 = vpop.permute.xlu0 %214
  %216 = vset.pattern.permute.xlu0 3
  %217 = vperm.xlu0 %216, %v206
  %v218 = vpop.permute.xlu0 %217
  %219 = vset.pattern.permute.xlu0 3
  %220 = vperm.xlu0 %219, %v207
  %v221 = vpop.permute.xlu0 %220
  %222 = vset.pattern.permute.xlu0 3
  %223 = vperm.xlu0 %222, %v208
  %v224 = vpop.permute.xlu0 %223
  %225 = vset.pattern.permute.xlu0 3
  %226 = vperm.xlu0 %225, %v209
  %v227 = vpop.permute.xlu0 %226
  %228 = vset.pattern.permute.xlu0 3
  %229 = vperm.xlu0 %228, %v210
  %v230 = vpop.permute.xlu0 %229
  %231 = vset.pattern.permute.xlu0 3
  %232 = vperm.xlu0 %231, %v211
  %v233 = vpop.permute.xlu0 %232
  %234 = vset.pattern.permute.xlu0 3
  %235 = vperm.xlu0 %234, %v212
  %v236 = vpop.permute.xlu0 %235
  %vm237 = vcmp.eq.s32.totalorder %v12, %v215
  %vm238 = vcmp.eq.s32.totalorder %v12, %v218
  %vm239 = vcmp.eq.s32.totalorder %v12, %v221
  %vm240 = vcmp.eq.s32.totalorder %v12, %v224
  %vm241 = vcmp.eq.s32.totalorder %v12, %v227
  %vm242 = vcmp.eq.s32.totalorder %v12, %v230
  %vm243 = vcmp.eq.s32.totalorder %v12, %v233
  %vm244 = vcmp.eq.s32.totalorder %v12, %v236
  %v245 = vsel %vm237, 1, 0
  %v246 = vsel %vm238, 1, 0
  %v247 = vsel %vm239, 1, 0
  %v248 = vsel %vm240, 1, 0
  %v249 = vsel %vm241, 1, 0
  %v250 = vsel %vm242, 1, 0
  %v251 = vsel %vm243, 1, 0
  %v252 = vsel %vm244, 1, 0
  %v253 = vcvt.s32.f32 %v245
  %v254 = vcvt.s32.f32 %v246
  %v255 = vcvt.s32.f32 %v247
  %v256 = vcvt.s32.f32 %v248
  %v257 = vcvt.s32.f32 %v249
  %v258 = vcvt.s32.f32 %v250
  %v259 = vcvt.s32.f32 %v251
  %v260 = vcvt.s32.f32 %v252
  %v261 = vadd.f32 %v197, %v253
  %v262 = vadd.f32 %v198, %v254
  %v263 = vadd.f32 %v199, %v255
  %v264 = vadd.f32 %v200, %v256
  %v265 = vadd.f32 %v201, %v257
  %v266 = vadd.f32 %v202, %v258
  %v267 = vadd.f32 %v203, %v259
  %v268 = vadd.f32 %v204, %v260
  %v269 = vld [vmem:[%s1] sm:$0xff]
  %v270 = vld [vmem:[%s1 + $0x8] sm:$0xff]
  %v271 = vld [vmem:[%s1 + $0x10] sm:$0xff]
  %v272 = vld [vmem:[%s1 + $0x18] sm:$0xff]
  %v273 = vld [vmem:[%s1 + $0x20] sm:$0xff]
  %v274 = vld [vmem:[%s1 + $0x28] sm:$0xff]
  %v275 = vld [vmem:[%s1 + $0x30] sm:$0xff]
  %v276 = vld [vmem:[%s1 + $0x38] sm:$0xff]
  %v277 = vld [vmem:[%s1 + $0x40] sm:$0xff]
  %v278 = vld [vmem:[%s1 + $0x48] sm:$0xff]
  %v279 = vld [vmem:[%s1 + $0x50] sm:$0xff]
  %v280 = vld [vmem:[%s1 + $0x58] sm:$0xff]
  %v281 = vld [vmem:[%s1 + $0x60] sm:$0xff]
  %v282 = vld [vmem:[%s1 + $0x68] sm:$0xff]
  %v283 = vld [vmem:[%s1 + $0x70] sm:$0xff]
  %v284 = vld [vmem:[%s1 + $0x78] sm:$0xff]
  %285 = vmatprep.subr.mxu0 0.0
  %286 = vmatpush1.msra.mxu0 %v284
  %287 = vmatprep.subr.mxu0 0.0
  %288 = vmatpush1.msra.mxu0 %v283
  %289 = vmatprep.subr.mxu0 0.0
  %290 = vmatpush1.msra.mxu0 %v282
  %291 = vmatprep.subr.mxu0 0.0
  %292 = vmatpush1.msra.mxu0 %v281
  %293 = vmatprep.subr.mxu0 0.0
  %294 = vmatpush1.msra.mxu0 %v280
  %295 = vmatprep.subr.mxu0 0.0
  %296 = vmatpush1.msra.mxu0 %v279
  %297 = vmatprep.subr.mxu0 0.0
  %298 = vmatpush1.msra.mxu0 %v278
  %299 = vmatprep.subr.mxu0 0.0
  %300 = vmatpush1.msra.mxu0 %v277
  %301 = vmatprep.subr.mxu0 0.0
  %302 = vmatpush1.msra.mxu0 %v276
  %303 = vmatprep.subr.mxu0 0.0
  %304 = vmatpush1.msra.mxu0 %v275
  %305 = vmatprep.subr.mxu0 0.0
  %306 = vmatpush1.msra.mxu0 %v274
  %307 = vmatprep.subr.mxu0 0.0
  %308 = vmatpush1.msra.mxu0 %v273
  %309 = vmatprep.subr.mxu0 0.0
  %310 = vmatpush1.msra.mxu0 %v272
  %311 = vmatprep.subr.mxu0 0.0
  %312 = vmatpush1.msra.mxu0 %v271
  %313 = vmatprep.subr.mxu0 0.0
  %314 = vmatpush1.msra.mxu0 %v270
  %315 = vmatprep.subr.mxu0 0.0
  %316 = vmatpush1.msra.mxu0 %v269
  %317 = vmatprep.subr.mxu0 0.0
  %318 = vmatpush2.msra.mxu0 0.0
  %319 = vmatprep.subr.mxu0 0.0
  %320 = vmatpush2.msra.mxu0 0.0
  %321 = vmatprep.subr.mxu0 0.0
  %322 = vmatpush2.msra.mxu0 0.0
  %323 = vmatprep.subr.mxu0 0.0
  %324 = vmatpush2.msra.mxu0 0.0
  %325 = vmatprep.subr.mxu0 0.0
  %326 = vmatpush2.msra.mxu0 0.0
  %327 = vmatprep.subr.mxu0 0.0
  %328 = vmatpush2.msra.mxu0 0.0
  %329 = vmatprep.subr.mxu0 0.0
  %330 = vmatpush2.msra.mxu0 0.0
  %331 = vmatprep.subr.mxu0 0.0
  %332 = vmatpush2.msra.mxu0 0.0
  %333 = vmatprep.subr.mxu0 0.0
  %334 = vmatpush2.msra.mxu0 0.0
  %335 = vmatprep.subr.mxu0 0.0
  %336 = vmatpush2.msra.mxu0 0.0
  %337 = vmatprep.subr.mxu0 0.0
  %338 = vmatpush2.msra.mxu0 0.0
  %339 = vmatprep.subr.mxu0 0.0
  %340 = vmatpush2.msra.mxu0 0.0
  %341 = vmatprep.subr.mxu0 0.0
  %342 = vmatpush2.msra.mxu0 0.0
  %343 = vmatprep.subr.mxu0 0.0
  %344 = vmatpush2.msra.mxu0 0.0
  %345 = vmatprep.subr.mxu0 0.0
  %346 = vmatpush2.msra.mxu0 0.0
  %347 = vmatprep.subr.mxu0 0.0
  %348 = vmatpush2.msra.mxu0 0.0
  %349 = vmatprep.mubr.f32.mxu0 0.0
  %350 = vmatmul.mubr.f32.gmra.mxu0 %v261
  %v351 = vpop.f32.mrf.mxu0
  %v352 = vadd.f32 0.0, %v351
  %v353 = vpop.f32.mrf.mxu0
  %354 = vmatprep.mubr.f32.mxu0 0.0
  %355 = vmatmul.mubr.f32.gmra.mxu0 %v262
  %v356 = vpop.f32.mrf.mxu0
  %v357 = vadd.f32 0.0, %v356
  %v358 = vpop.f32.mrf.mxu0
  %359 = vmatprep.mubr.f32.mxu0 0.0
  %360 = vmatmul.mubr.f32.gmra.mxu0 %v263
  %v361 = vpop.f32.mrf.mxu0
  %v362 = vadd.f32 0.0, %v361
  %v363 = vpop.f32.mrf.mxu0
  %364 = vmatprep.mubr.f32.mxu0 0.0
  %365 = vmatmul.mubr.f32.gmra.mxu0 %v264
  %v366 = vpop.f32.mrf.mxu0
  %v367 = vadd.f32 0.0, %v366
  %v368 = vpop.f32.mrf.mxu0
  %369 = vmatprep.mubr.f32.mxu0 0.0
  %370 = vmatmul.mubr.f32.gmra.mxu0 %v265
  %v371 = vpop.f32.mrf.mxu0
  %v372 = vadd.f32 0.0, %v371
  %v373 = vpop.f32.mrf.mxu0
  %374 = vmatprep.mubr.f32.mxu0 0.0
  %375 = vmatmul.mubr.f32.gmra.mxu0 %v266
  %v376 = vpop.f32.mrf.mxu0
  %v377 = vadd.f32 0.0, %v376
  %v378 = vpop.f32.mrf.mxu0
  %379 = vmatprep.mubr.f32.mxu0 0.0
  %380 = vmatmul.mubr.f32.gmra.mxu0 %v267
  %v381 = vpop.f32.mrf.mxu0
  %v382 = vadd.f32 0.0, %v381
  %v383 = vpop.f32.mrf.mxu0
  %384 = vmatprep.mubr.f32.mxu0 0.0
  %385 = vmatmul.mubr.f32.gmra.mxu0 %v268
  %v386 = vpop.f32.mrf.mxu0
  %v387 = vadd.f32 0.0, %v386
  %v388 = vpop.f32.mrf.mxu0
  %389 = vdwg.mxu0
  %390 = vst [vmem:[%s2] sm:$0xff] %v352
  %391 = vst [vmem:[%s2 + $0x8] sm:$0xff] %v357
  %392 = vst [vmem:[%s2 + $0x10] sm:$0xff] %v362
  %393 = vst [vmem:[%s2 + $0x18] sm:$0xff] %v367
  %394 = vst [vmem:[%s2 + $0x20] sm:$0xff] %v372
  %395 = vst [vmem:[%s2 + $0x28] sm:$0xff] %v377
  %396 = vst [vmem:[%s2 + $0x30] sm:$0xff] %v382
  %397 = vst [vmem:[%s2 + $0x38] sm:$0xff] %v387
  // Predicated region
  $region10: #{embedding2d_forward.1} parent=0 // pred_check
    _
  $region11: #{embedding2d_forward.1} parent=0 // pred_check_branch
    %399 = sbr.rel (0) target = $region13
  $region12: #{embedding2d_forward.1} parent=0 // pred_region
    _
  $region13: #{embedding2d_forward.1} parent=0 // pred_fallthru
    _
  // Predicated region
  $region14: #{embedding2d_forward.1} parent=0 // pred_check
    _
  $region15: #{embedding2d_forward.1} parent=0 // pred_check_branch
    %401 = sbr.rel (0) target = $region17
  $region16: #{embedding2d_forward.1} parent=0 // pred_region
    _
  $region17: #{embedding2d_forward.1} parent=0 // pred_fallthru
    _

</llo_original>
